<compile_context>
chip_gen: v7x
topology: tpu7x:2x2x1
jax: 0.10.0
libtpu: 0.0.40
codegen_flags: <defaults>
</compile_context>

<pallas_src>
import functools

import jax
import jax.numpy as jnp
import numpy as np
from jax.experimental import pallas as pl
from jax.experimental.pallas import tpu as pltpu

BN_EPS = 1e-5       # torch BatchNorm1d default eps
L2_EPS = 1e-12      # F.normalize default eps
C_HID = 128         # lane-padded channel width used for all packed weights/activations


def _ceil_to(v, m):
    return ((v + m - 1) // m) * m


# ----------------------------- Pallas kernel ---------------------------------
def _graphnet_kernel(num_graphs, emb_size, seg_offsets, w_slices,
                     adj_ref, x_ref, w_ref, b_ref, out_ref, pooled_ref):
    adj = adj_ref[...]                      # (Np, Np) GCN-normalized adjacency
    h = x_ref[...]                          # (Np, rin) node features (zero-padded cols)
    biases = b_ref[...]                     # (8, 128): rows 0..2 GCN (BN-folded), 3 fc1, 4 fc2

    (s1, r1), (s2, r2), (s3, r3), (s4, r4), (s5, r5) = w_slices

    def gcn_block(h, w, b):
        # GCNConv with BN folded into (w, b): relu(Ahat @ (h @ w) + b)
        h = jnp.dot(h, w, preferred_element_type=jnp.float32)
        h = jnp.dot(adj, h, preferred_element_type=jnp.float32) + b
        return jnp.maximum(h, 0.0)

    h = gcn_block(h, w_ref[s1:s1 + r1, :], biases[0:1, :])   # (Np, 128), cols 32+ are 0
    h = gcn_block(h, w_ref[s2:s2 + r2, :], biases[1:2, :])   # (Np, 128), cols 64+ are 0
    h = gcn_block(h, w_ref[s3:s3 + r3, :], biases[2:3, :])   # (Np, 128)

    # global_max_pool over contiguous per-graph node segments.
    # Post-ReLU h >= 0, so an empty segment safely pools to 0 (no -inf / NaN risk).
    for g in range(num_graphs):
        lo, hi = seg_offsets[g], seg_offsets[g + 1]
        if hi > lo:
            pooled_ref[g:g + 1, :] = jnp.max(h[lo:hi, :], axis=0, keepdims=True)
        else:
            pooled_ref[g:g + 1, :] = jnp.zeros((1, C_HID), jnp.float32)
    pooled = pooled_ref[...]                # (num_graphs, 128)

    # fc1 (+bn4 folded) -> relu -> (dropout=identity) -> fc2 -> L2 normalize
    z = jnp.dot(pooled, w_ref[s4:s4 + r4, :],
                preferred_element_type=jnp.float32) + biases[3:4, :]
    z = jnp.maximum(z, 0.0)
    # TODO(synk): Dropout(p=0.5) layers are identity here (eval-mode forward); training RNG mask omitted.
    z = jnp.dot(z, w_ref[s5:s5 + r5, :],
                preferred_element_type=jnp.float32) + biases[4:5, :]

    # Padded columns of z (>= emb_size) are exactly zero, so the sumsq is exact.
    ss = jnp.sum(z * z, axis=1, keepdims=True)
    inv = jax.lax.rsqrt(jnp.maximum(ss, L2_EPS * L2_EPS))   # == 1 / max(||z||_2, eps)
    out_ref[...] = (z * inv)[:, :emb_size]


# --------------------------- host-side param packing -------------------------
def pack_params(params, num_node_features, emb_size):
    (w1, b1, g1, be1, w2, b2, g2, be2, w3, b3, g3, be3,
     fc1w, fc1b, g4, be4, fc2w, fc2b) = params
    s = 1.0 / np.sqrt(1.0 + BN_EPS)         # eval-mode BN: running_mean=0, running_var=1

    def fold(w, b, gm, bt):                  # BN(gamma,beta) folded into linear layer
        sc = gm * s                          # (1, fo)
        return w * sc, b * sc + bt

    w1f, b1f = fold(w1, b1, g1, be1)
    w2f, b2f = fold(w2, b2, g2, be2)
    w3f, b3f = fold(w3, b3, g3, be3)
    f1f, f1b = fold(fc1w, fc1b, g4, be4)

    rin = _ceil_to(num_node_features, 8)

    def pad(a, rows):
        r, c = a.shape
        return jnp.pad(a.astype(jnp.float32), ((0, rows - r), (0, C_HID - c)))

    # All activations are kept at 128 lanes; every weight (except the first) is padded
    # to 128 rows so h @ w is a full-tile matmul. Zero-padding keeps the math exact.
    blocks = [(w1f, rin), (w2f, C_HID), (w3f, C_HID), (f1f, C_HID), (fc2w, C_HID)]
    packed, w_slices, off = [], [], 0
    for w, rows in blocks:
        packed.append(pad(w, rows))
        w_slices.append((off, rows))
        off += rows
    w_pack = jnp.concatenate(packed, axis=0)                         # (8+4*128, 128)
    b_pack = jnp.concatenate([pad(b, 1) for b in (b1f, b2f, b3f, f1b, fc2b)]
                             + [jnp.zeros((3, C_HID), jnp.float32)], axis=0)  # (8, 128)
    return w_pack, b_pack, tuple(w_slices), rin


# ------------------------------ wrapper ---------------------------------------
def graphnet_forward(adj, x, batch, params, num_graphs, emb_size, num_node_features):
    N = x.shape[0]

    # Contiguous per-graph node segments (PyG batching convention: batch is sorted).
    b_np = np.asarray(batch)
    assert np.all(np.diff(b_np) >= 0), "batch must be sorted (PyG convention)"
    counts = np.bincount(b_np, minlength=num_graphs)[:num_graphs]
    seg_offsets = tuple(int(v) for v in np.concatenate([[0], np.cumsum(counts)]))

    w_pack, b_pack, w_slices, rin = pack_params(params, num_node_features, emb_size)

    Np = _ceil_to(N, 8)
    adj_p = jnp.pad(adj.astype(jnp.float32), ((0, Np - N), (0, Np - N)))
    x_p = jnp.pad(x.astype(jnp.float32), ((0, Np - N), (0, rin - x.shape[1])))

    kernel = functools.partial(_graphnet_kernel, num_graphs, emb_size,
                               seg_offsets, w_slices)
    return pl.pallas_call(
        kernel,
        out_shape=jax.ShapeDtypeStruct((num_graphs, emb_size), jnp.float32),
        in_specs=[pl.BlockSpec(memory_space=pltpu.MemorySpace.VMEM)] * 4,
        out_specs=pl.BlockSpec(memory_space=pltpu.MemorySpace.VMEM),
        scratch_shapes=[pltpu.VMEM((num_graphs, C_HID), jnp.float32)],
    )(adj_p, x_p, w_pack, b_pack)


# --------------------------- plain-JAX glue -----------------------------------
def gcn_norm_adj(edge_index, num_nodes):
    """Dense GCN normalization: Ahat = D^-1/2 (A + I) D^-1/2 (self-loops added)."""
    loop = jnp.arange(num_nodes, dtype=edge_index.dtype)
    src = jnp.concatenate([edge_index[0], loop])
    dst = jnp.concatenate([edge_index[1], loop])
    A = jnp.zeros((num_nodes, num_nodes), jnp.float32).at[dst, src].set(1.0)
    deg = A.sum(axis=1)
    dinv = jnp.where(deg > 0, 1.0 / jnp.sqrt(deg), 0.0)
    return dinv[:, None] * A * dinv[None, :]


def glorot(key, fan_in, fan_out):
    lim = np.sqrt(6.0 / (fan_in + fan_out))
    return jax.random.uniform(key, (fan_in, fan_out), jnp.float32, -lim, lim)


def init_params(key, num_node_features=6, emb_size=64):
    dims = [(num_node_features, 32), (32, 64), (64, 128)]
    keys = jax.random.split(key, 16)
    params = []
    ki = 0
    for (fi, fo) in dims:                        # three GCNConv + BatchNorm blocks
        w = glorot(keys[ki], fi, fo); ki += 1
        b = jnp.zeros((1, fo), jnp.float32)      # GCNConv bias init = 0
        gamma = 1.0 + 0.1 * jax.random.normal(keys[ki], (1, fo), jnp.float32); ki += 1
        beta = 0.1 * jax.random.normal(keys[ki], (1, fo), jnp.float32); ki += 1
        params += [w, b, gamma, beta]
    fc1w = glorot(keys[ki], 128, 128); ki += 1
    fc1b = 0.1 * jax.random.normal(keys[ki], (1, 128), jnp.float32); ki += 1
    g4 = 1.0 + 0.1 * jax.random.normal(keys[ki], (1, 128), jnp.float32); ki += 1
    be4 = 0.1 * jax.random.normal(keys[ki], (1, 128), jnp.float32); ki += 1
    fc2w = glorot(keys[ki], 128, emb_size); ki += 1
    fc2b = 0.1 * jax.random.normal(keys[ki], (1, emb_size), jnp.float32); ki += 1
    params += [fc1w, fc1b, g4, be4, fc2w, fc2b]
    return tuple(params)


def reference_forward(adj, x, batch, params, num_graphs):
    """Pure-jnp replica of the module math (unfolded BN) for verification."""
    (w1, b1, g1, be1, w2, b2, g2, be2, w3, b3, g3, be3,
     fc1w, fc1b, g4, be4, fc2w, fc2b) = params
    s = 1.0 / np.sqrt(1.0 + BN_EPS)

    def block(h, w, b, gm, bt):
        h = adj @ (h @ w) + b
        return jnp.maximum(gm * (h * s) + bt, 0.0)

    h = block(x, w1, b1, g1, be1)
    h = block(h, w2, b2, g2, be2)
    h = block(h, w3, b3, g3, be3)
    pooled = jnp.stack([jnp.max(jnp.where((batch == g)[:, None], h, -jnp.inf), axis=0)
                        for g in range(num_graphs)], axis=0)
    z = jnp.maximum(g4 * ((pooled @ fc1w + fc1b) * s) + be4, 0.0)
    z = z @ fc2w + fc2b
    return z / jnp.maximum(jnp.sqrt(jnp.sum(z * z, axis=1, keepdims=True)), L2_EPS)


# ------------------------------- demo -----------------------------------------
if __name__ == "__main__":
    key = jax.random.PRNGKey(0)
    num_node_features, emb_size = 6, 64
    nodes_per_graph, num_graphs = 8, 4
    num_nodes = nodes_per_graph * num_graphs          # 32 nodes total

    kx, kp = jax.random.split(key)
    x = jax.random.normal(kx, (num_nodes, num_node_features), jnp.float32)

    # Undirected chain edges within each graph (both directions), COO edge_index (2, E)
    src_list, dst_list = [], []
    for g in range(num_graphs):
        base = g * nodes_per_graph
        for i in range(nodes_per_graph - 1):
            src_list += [base + i, base + i + 1]
            dst_list += [base + i + 1, base + i]
    edge_index = jnp.array([src_list, dst_list], dtype=jnp.int32)

    batch = jnp.repeat(jnp.arange(num_graphs, dtype=jnp.int32), nodes_per_graph)

    adj = gcn_norm_adj(edge_index, num_nodes)
    params = init_params(kp, num_node_features, emb_size)

    out = graphnet_forward(adj, x, batch, params, num_graphs, emb_size, num_node_features)
    out = jax.block_until_ready(out)

    ref = reference_forward(adj, x, batch, params, num_graphs)
    np.testing.assert_allclose(np.asarray(out), np.asarray(ref), rtol=1e-5, atol=1e-5)

    print("KERNEL_OK")
</pallas_src>

<mosaic_0001>
module attributes {stable_mosaic.version = 11 : i64} {
  func.func @_graphnet_kernel(%arg0: memref<32x32xf32, #tpu.memory_space<vmem>>, %arg1: memref<32x8xf32, #tpu.memory_space<vmem>>, %arg2: memref<520x128xf32, #tpu.memory_space<vmem>>, %arg3: memref<8x128xf32, #tpu.memory_space<vmem>>, %arg4: memref<4x64xf32, #tpu.memory_space<vmem>>, %arg5: memref<4x128xf32, #tpu.memory_space<vmem>>) attributes {dimension_semantics = [], scalar_prefetch = 0 : i64, scratch_operands = 1 : i64, tpu.core_type = #tpu.core_type<tc>} {
    %c0 = arith.constant 0 : index
    %c0_0 = arith.constant 0 : index
    %0 = vector.load %arg0[%c0, %c0_0] : memref<32x32xf32, #tpu.memory_space<vmem>>, vector<32x32xf32>
    %c0_1 = arith.constant 0 : index
    %c0_2 = arith.constant 0 : index
    %1 = vector.load %arg1[%c0_1, %c0_2] : memref<32x8xf32, #tpu.memory_space<vmem>>, vector<32x8xf32>
    %c0_3 = arith.constant 0 : index
    %c0_4 = arith.constant 0 : index
    %2 = vector.load %arg3[%c0_3, %c0_4] : memref<8x128xf32, #tpu.memory_space<vmem>>, vector<8x128xf32>
    %c0_5 = arith.constant 0 : index
    %c0_6 = arith.constant 0 : index
    %3 = vector.load %arg2[%c0_5, %c0_6] : memref<520x128xf32, #tpu.memory_space<vmem>>, vector<8x128xf32>
    %4 = vector.extract_strided_slice %2 {offsets = [0, 0], sizes = [1, 128], strides = [1, 1]} : vector<8x128xf32> to vector<1x128xf32>
    %cst = arith.constant dense<0.000000e+00> : vector<32x128xf32>
    %5 = tpu.matmul %1, %3, %cst {dimension_numbers = #tpu.dot_dimension_numbers<[1], [0], [0], [1], [0, 0, 1, 1], [], []>} : vector<32x8xf32>, vector<8x128xf32>, vector<32x128xf32> -> vector<32x128xf32>
    %cst_7 = arith.constant dense<0.000000e+00> : vector<32x128xf32>
    %6 = tpu.matmul %0, %5, %cst_7 {dimension_numbers = #tpu.dot_dimension_numbers<[1], [0], [0], [1], [0, 0, 1, 1], [], []>} : vector<32x32xf32>, vector<32x128xf32>, vector<32x128xf32> -> vector<32x128xf32>
    %7 = vector.broadcast %4 : vector<1x128xf32> to vector<32x128xf32>
    %8 = arith.addf %6, %7 : vector<32x128xf32>
    %cst_8 = arith.constant 0.000000e+00 : f32
    %9 = vector.broadcast %cst_8 : f32 to vector<32x128xf32>
    %10 = arith.maximumf %8, %9 : vector<32x128xf32>
    %c8 = arith.constant 8 : index
    %c0_9 = arith.constant 0 : index
    %11 = vector.load %arg2[%c8, %c0_9] : memref<520x128xf32, #tpu.memory_space<vmem>>, vector<128x128xf32>
    %12 = vector.extract_strided_slice %2 {offsets = [1, 0], sizes = [1, 128], strides = [1, 1]} : vector<8x128xf32> to vector<1x128xf32>
    %cst_10 = arith.constant dense<0.000000e+00> : vector<32x128xf32>
    %13 = tpu.matmul %10, %11, %cst_10 {dimension_numbers = #tpu.dot_dimension_numbers<[1], [0], [0], [1], [0, 0, 1, 1], [], []>} : vector<32x128xf32>, vector<128x128xf32>, vector<32x128xf32> -> vector<32x128xf32>
    %cst_11 = arith.constant dense<0.000000e+00> : vector<32x128xf32>
    %14 = tpu.matmul %0, %13, %cst_11 {dimension_numbers = #tpu.dot_dimension_numbers<[1], [0], [0], [1], [0, 0, 1, 1], [], []>} : vector<32x32xf32>, vector<32x128xf32>, vector<32x128xf32> -> vector<32x128xf32>
    %15 = vector.broadcast %12 : vector<1x128xf32> to vector<32x128xf32>
    %16 = arith.addf %14, %15 : vector<32x128xf32>
    %cst_12 = arith.constant 0.000000e+00 : f32
    %17 = vector.broadcast %cst_12 : f32 to vector<32x128xf32>
    %18 = arith.maximumf %16, %17 : vector<32x128xf32>
    %c136 = arith.constant 136 : index
    %c0_13 = arith.constant 0 : index
    %19 = vector.load %arg2[%c136, %c0_13] : memref<520x128xf32, #tpu.memory_space<vmem>>, vector<128x128xf32>
    %20 = vector.extract_strided_slice %2 {offsets = [2, 0], sizes = [1, 128], strides = [1, 1]} : vector<8x128xf32> to vector<1x128xf32>
    %cst_14 = arith.constant dense<0.000000e+00> : vector<32x128xf32>
    %21 = tpu.matmul %18, %19, %cst_14 {dimension_numbers = #tpu.dot_dimension_numbers<[1], [0], [0], [1], [0, 0, 1, 1], [], []>} : vector<32x128xf32>, vector<128x128xf32>, vector<32x128xf32> -> vector<32x128xf32>
    %cst_15 = arith.constant dense<0.000000e+00> : vector<32x128xf32>
    %22 = tpu.matmul %0, %21, %cst_15 {dimension_numbers = #tpu.dot_dimension_numbers<[1], [0], [0], [1], [0, 0, 1, 1], [], []>} : vector<32x32xf32>, vector<32x128xf32>, vector<32x128xf32> -> vector<32x128xf32>
    %23 = vector.broadcast %20 : vector<1x128xf32> to vector<32x128xf32>
    %24 = arith.addf %22, %23 : vector<32x128xf32>
    %cst_16 = arith.constant 0.000000e+00 : f32
    %25 = vector.broadcast %cst_16 : f32 to vector<32x128xf32>
    %26 = arith.maximumf %24, %25 : vector<32x128xf32>
    %27 = vector.extract_strided_slice %26 {offsets = [0, 0], sizes = [8, 128], strides = [1, 1]} : vector<32x128xf32> to vector<8x128xf32>
    %cst_17 = arith.constant dense<0xFF800000> : vector<128xf32>
    %28 = vector.multi_reduction <maximumf>, %27, %cst_17 [0] : vector<8x128xf32> to vector<128xf32>
    %29 = vector.shape_cast %28 : vector<128xf32> to vector<1x128xf32>
    %c0_18 = arith.constant 0 : index
    %c0_19 = arith.constant 0 : index
    %30 = vector.load %arg5[%c0_18, %c0_19] : memref<4x128xf32, #tpu.memory_space<vmem>>, vector<1x128xf32>
    tpu.vector_store %arg5[%c0_18, %c0_19], %29 {strides = array<i32>} : memref<4x128xf32, #tpu.memory_space<vmem>>, vector<1x128xf32>,
    %31 = vector.extract_strided_slice %26 {offsets = [8, 0], sizes = [8, 128], strides = [1, 1]} : vector<32x128xf32> to vector<8x128xf32>
    %cst_20 = arith.constant dense<0xFF800000> : vector<128xf32>
    %32 = vector.multi_reduction <maximumf>, %31, %cst_20 [0] : vector<8x128xf32> to vector<128xf32>
    %33 = vector.shape_cast %32 : vector<128xf32> to vector<1x128xf32>
    %c1 = arith.constant 1 : index
    %c0_21 = arith.constant 0 : index
    %34 = vector.load %arg5[%c1, %c0_21] : memref<4x128xf32, #tpu.memory_space<vmem>>, vector<1x128xf32>
    tpu.vector_store %arg5[%c1, %c0_21], %33 {strides = array<i32>} : memref<4x128xf32, #tpu.memory_space<vmem>>, vector<1x128xf32>,
    %35 = vector.extract_strided_slice %26 {offsets = [16, 0], sizes = [8, 128], strides = [1, 1]} : vector<32x128xf32> to vector<8x128xf32>
    %cst_22 = arith.constant dense<0xFF800000> : vector<128xf32>
    %36 = vector.multi_reduction <maximumf>, %35, %cst_22 [0] : vector<8x128xf32> to vector<128xf32>
    %37 = vector.shape_cast %36 : vector<128xf32> to vector<1x128xf32>
    %c2 = arith.constant 2 : index
    %c0_23 = arith.constant 0 : index
    %38 = vector.load %arg5[%c2, %c0_23] : memref<4x128xf32, #tpu.memory_space<vmem>>, vector<1x128xf32>
    tpu.vector_store %arg5[%c2, %c0_23], %37 {strides = array<i32>} : memref<4x128xf32, #tpu.memory_space<vmem>>, vector<1x128xf32>,
    %39 = vector.extract_strided_slice %26 {offsets = [24, 0], sizes = [8, 128], strides = [1, 1]} : vector<32x128xf32> to vector<8x128xf32>
    %cst_24 = arith.constant dense<0xFF800000> : vector<128xf32>
    %40 = vector.multi_reduction <maximumf>, %39, %cst_24 [0] : vector<8x128xf32> to vector<128xf32>
    %41 = vector.shape_cast %40 : vector<128xf32> to vector<1x128xf32>
    %c3 = arith.constant 3 : index
    %c0_25 = arith.constant 0 : index
    %42 = vector.load %arg5[%c3, %c0_25] : memref<4x128xf32, #tpu.memory_space<vmem>>, vector<1x128xf32>
    tpu.vector_store %arg5[%c3, %c0_25], %41 {strides = array<i32>} : memref<4x128xf32, #tpu.memory_space<vmem>>, vector<1x128xf32>,
    %c0_26 = arith.constant 0 : index
    %c0_27 = arith.constant 0 : index
    %43 = vector.load %arg5[%c0_26, %c0_27] : memref<4x128xf32, #tpu.memory_space<vmem>>, vector<4x128xf32>
    %c264 = arith.constant 264 : index
    %c0_28 = arith.constant 0 : index
    %44 = vector.load %arg2[%c264, %c0_28] : memref<520x128xf32, #tpu.memory_space<vmem>>, vector<128x128xf32>
    %cst_29 = arith.constant dense<0.000000e+00> : vector<4x128xf32>
    %45 = tpu.matmul %43, %44, %cst_29 {dimension_numbers = #tpu.dot_dimension_numbers<[1], [0], [0], [1], [0, 0, 1, 1], [], []>} : vector<4x128xf32>, vector<128x128xf32>, vector<4x128xf32> -> vector<4x128xf32>
    %46 = vector.extract_strided_slice %2 {offsets = [3, 0], sizes = [1, 128], strides = [1, 1]} : vector<8x128xf32> to vector<1x128xf32>
    %47 = vector.broadcast %46 : vector<1x128xf32> to vector<4x128xf32>
    %48 = arith.addf %45, %47 : vector<4x128xf32>
    %cst_30 = arith.constant 0.000000e+00 : f32
    %49 = vector.broadcast %cst_30 : f32 to vector<4x128xf32>
    %50 = arith.maximumf %48, %49 : vector<4x128xf32>
    %c392 = arith.constant 392 : index
    %c0_31 = arith.constant 0 : index
    %51 = vector.load %arg2[%c392, %c0_31] : memref<520x128xf32, #tpu.memory_space<vmem>>, vector<128x128xf32>
    %cst_32 = arith.constant dense<0.000000e+00> : vector<4x128xf32>
    %52 = tpu.matmul %50, %51, %cst_32 {dimension_numbers = #tpu.dot_dimension_numbers<[1], [0], [0], [1], [0, 0, 1, 1], [], []>} : vector<4x128xf32>, vector<128x128xf32>, vector<4x128xf32> -> vector<4x128xf32>
    %53 = vector.extract_strided_slice %2 {offsets = [4, 0], sizes = [1, 128], strides = [1, 1]} : vector<8x128xf32> to vector<1x128xf32>
    %54 = vector.broadcast %53 : vector<1x128xf32> to vector<4x128xf32>
    %55 = arith.addf %52, %54 : vector<4x128xf32>
    %56 = arith.mulf %55, %55 : vector<4x128xf32>
    %cst_33 = arith.constant dense<0.000000e+00> : vector<4xf32>
    %57 = vector.multi_reduction <add>, %56, %cst_33 [1] : vector<4x128xf32> to vector<4xf32>
    %58 = vector.shape_cast %57 : vector<4xf32> to vector<4x1xf32>
    %cst_34 = arith.constant 1.000000e-24 : f32
    %59 = vector.broadcast %cst_34 : f32 to vector<4x1xf32>
    %60 = arith.maximumf %58, %59 : vector<4x1xf32>
    %61 = math.rsqrt %60 : vector<4x1xf32>
    %62 = vector.broadcast %61 : vector<4x1xf32> to vector<4x128xf32>
    %63 = arith.mulf %55, %62 : vector<4x128xf32>
    %64 = vector.extract_strided_slice %63 {offsets = [0, 0], sizes = [4, 64], strides = [1, 1]} : vector<4x128xf32> to vector<4x64xf32>
    %c0_35 = arith.constant 0 : index
    %c0_36 = arith.constant 0 : index
    %65 = vector.load %arg4[%c0_35, %c0_36] : memref<4x64xf32, #tpu.memory_space<vmem>>, vector<4x64xf32>
    tpu.vector_store %arg4[%c0_35, %c0_36], %64 {strides = array<i32>} : memref<4x64xf32, #tpu.memory_space<vmem>>, vector<4x64xf32>,
    return
  }
}

</mosaic_0001>

<llo_original>
// kernel: tpu_custom_call.1
$region0: #{tpu_custom_call.1}
  #allocation0 [shape = 'u32[]', space=smem, size = 0x4, offset = 0x4, fixed_abs, tag = 'smem constant byte address 0x4 - core index']
  #allocation1 [shape = 'u32[144,128]{1,0:T(1,128)}', space=vmem, size = 0x12000, scoped, tag = 'internal scratch']
  #allocation2 [shape = 'f32[4,128]{1,0:T(4,128)}', space=vmem, size = 0x800, scoped, tag = 'scratch operand']
  %s0 = inlined_call_operand.vmem [shape: f32[32,32], index: 0, kind: input, shape index: {}]
  %s1 = inlined_call_operand.vmem [shape: f32[32,8], index: 1, kind: input, shape index: {}]
  %s2 = inlined_call_operand.hbm [shape: f32[520,128], index: 2, kind: input, shape index: {}]
  %s3 = inlined_call_operand.vmem [shape: f32[8,128], index: 3, kind: input, shape index: {}]
  %s4 = inlined_call_operand.hbm [shape: f32[4,64], index: 4, kind: output, shape index: {}]
  %s5 = sld [smem:[#allocation0]]
  $region30: #{tpu_custom_call.1} parent=0
    _
  %s7 = ssub.s32 1, %s5
  %s8 = scalar_select 0, %s7, %s5
  $region1: #{tpu_custom_call.1} parent=0
    #allocation3 [shape = 'u8[266240]{0}', space=vmem, size = 0x41000, scoped, tag = 'input window, operand 2, single buffered']
    #allocation4 [shape = 's32[1]{0}', space=sflag, size = 0x4, scoped, tag = 'scoped memory for tpu_custom_call.1']
    #allocation5 [shape = 's32[1]{0}', space=sflag, size = 0x4, scoped, tag = 'scoped memory for tpu_custom_call.1']
    #allocation6 [shape = 'u8[2048]{0}', space=vmem, size = 0x800, scoped, tag = 'output window, operand 0, single buffered']
    %9 = vsyncpa [#allocation4], 0
    %10 = vsyncpa [#allocation5], 0
    // Predicated region
    $region2: #{tpu_custom_call.1} parent=1 // pred_check
      _
    $region3: #{tpu_custom_call.1} parent=1 // pred_check_branch
      %12 = sbr.rel (0) target = $region5
    $region4: #{tpu_custom_call.1} parent=1 // pred_region
      _
    $region5: #{tpu_custom_call.1} parent=1 // pred_fallthru
      _
    // Predicated region
    $region6: #{tpu_custom_call.1} parent=1 // pred_check
      _
    $region7: #{tpu_custom_call.1} parent=1 // pred_check_branch
      %14 = sbr.rel (0) target = $region9
    $region8: #{tpu_custom_call.1} parent=1 // pred_region
      _
    $region9: #{tpu_custom_call.1} parent=1 // pred_fallthru
      _
    // Predicated region
    $region10: #{tpu_custom_call.1} parent=1 // pred_check
      _
    $region11: #{tpu_custom_call.1} parent=1 // pred_check_branch
      %16 = sbr.rel (0) target = $region13
    $region12: #{tpu_custom_call.1} parent=1 // pred_region
      %s18 = ssub.s32 8320, 8320
      %19 = vsyncadd [#allocation4], %s18
      %s20 = sshll.u32 [#allocation3], 4
      %s21 = int_to_ptr.vmem [resolvable:$true] %s20
      %26 = dma.hbm_to_vmem [thread:$0]  %s2, 8320, %s21, [#allocation4], 128, 128, 8
    $region13: #{tpu_custom_call.1} parent=1 // pred_fallthru
      _
    // Predicated region
    $region14: #{tpu_custom_call.1} parent=1 // pred_check
      _
    $region15: #{tpu_custom_call.1} parent=1 // pred_check_branch
      %28 = sbr.rel (0) target = $region17
    $region16: #{tpu_custom_call.1} parent=1 // pred_region
      _
    $region17: #{tpu_custom_call.1} parent=1 // pred_fallthru
      _
    // Predicated region
    $region18: #{tpu_custom_call.1} parent=1 // pred_check
      _
    $region19: #{tpu_custom_call.1} parent=1 // pred_check_branch
      %30 = sbr.rel (0) target = $region21
    $region20: #{tpu_custom_call.1} parent=1 // pred_region
      %31 = dma.done [#allocation4], 8320
    $region21: #{tpu_custom_call.1} parent=1 // pred_fallthru
      _
    %v32 = vld [vmem:[%s0] sm:$0xff]
    %v33 = vld [vmem:[%s0 + $0x8] sm:$0xff]
    %v34 = vld [vmem:[%s0 + $0x10] sm:$0xff]
    %v35 = vld [vmem:[%s0 + $0x18] sm:$0xff]
    %v36 = vld [vmem:[%s1] sm:$0xff]
    %v37 = vld [vmem:[%s1 + $0x8] sm:$0xff]
    %v38 = vld [vmem:[%s1 + $0x10] sm:$0xff]
    %v39 = vld [vmem:[%s1 + $0x18] sm:$0xff]
    %v40 = vld [vmem:[%s3] sm:$0xff]
    %v41 = vld [vmem:[#allocation3] sm:$0xff]
    %vm42 = vcmask 64512
    %v44 = vsel %vm42, %v36, 0
    %v47 = vsel %vm42, %v37, 0
    %v50 = vsel %vm42, %v38, 0
    %v53 = vsel %vm42, %v39, 0
    %55 = vmatprep.subr.mxu0 0.0
    %56 = vmatpush1.msra.mxu0 %v41
    %57 = vmatprep.subr.mxu0 0.0
    %58 = vmatpush1.msra.mxu0 0.0
    %59 = vmatprep.subr.mxu0 0.0
    %60 = vmatpush1.msra.mxu0 0.0
    %61 = vmatprep.subr.mxu0 0.0
    %62 = vmatpush1.msra.mxu0 0.0
    %63 = vmatprep.subr.mxu0 0.0
    %64 = vmatpush1.msra.mxu0 0.0
    %65 = vmatprep.subr.mxu0 0.0
    %66 = vmatpush1.msra.mxu0 0.0
    %67 = vmatprep.subr.mxu0 0.0
    %68 = vmatpush1.msra.mxu0 0.0
    %69 = vmatprep.subr.mxu0 0.0
    %70 = vmatpush1.msra.mxu0 0.0
    %71 = vmatprep.subr.mxu0 0.0
    %72 = vmatpush1.msra.mxu0 0.0
    %73 = vmatprep.subr.mxu0 0.0
    %74 = vmatpush1.msra.mxu0 0.0
    %75 = vmatprep.subr.mxu0 0.0
    %76 = vmatpush1.msra.mxu0 0.0
    %77 = vmatprep.subr.mxu0 0.0
    %78 = vmatpush1.msra.mxu0 0.0
    %79 = vmatprep.subr.mxu0 0.0
    %80 = vmatpush1.msra.mxu0 0.0
    %81 = vmatprep.subr.mxu0 0.0
    %82 = vmatpush1.msra.mxu0 0.0
    %83 = vmatprep.subr.mxu0 0.0
    %84 = vmatpush1.msra.mxu0 0.0
    %85 = vmatprep.subr.mxu0 0.0
    %86 = vmatpush1.msra.mxu0 0.0
    %87 = vmatprep.subr.mxu0 0.0
    %88 = vmatpush1.msra.mxu0 0.0
    %89 = vmatprep.subr.mxu0 0.0
    %90 = vmatpush1.msra.mxu0 0.0
    %91 = vmatprep.subr.mxu0 0.0
    %92 = vmatpush1.msra.mxu0 0.0
    %93 = vmatprep.subr.mxu0 0.0
    %94 = vmatpush1.msra.mxu0 0.0
    %95 = vmatprep.subr.mxu0 0.0
    %96 = vmatpush1.msra.mxu0 0.0
    %97 = vmatprep.subr.mxu0 0.0
    %98 = vmatpush1.msra.mxu0 0.0
    %99 = vmatprep.subr.mxu0 0.0
    %100 = vmatpush1.msra.mxu0 0.0
    %101 = vmatprep.subr.mxu0 0.0
    %102 = vmatpush1.msra.mxu0 0.0
    %103 = vmatprep.subr.mxu0 0.0
    %104 = vmatpush1.msra.mxu0 0.0
    %105 = vmatprep.subr.mxu0 0.0
    %106 = vmatpush1.msra.mxu0 0.0
    %107 = vmatprep.subr.mxu0 0.0
    %108 = vmatpush1.msra.mxu0 0.0
    %109 = vmatprep.subr.mxu0 0.0
    %110 = vmatpush1.msra.mxu0 0.0
    %111 = vmatprep.subr.mxu0 0.0
    %112 = vmatpush1.msra.mxu0 0.0
    %113 = vmatprep.subr.mxu0 0.0
    %114 = vmatpush1.msra.mxu0 0.0
    %115 = vmatprep.subr.mxu0 0.0
    %116 = vmatpush1.msra.mxu0 0.0
    %117 = vmatprep.subr.mxu0 0.0
    %118 = vmatpush1.msra.mxu0 0.0
    %119 = vmatprep.mubr.f32.mxu0 0.0
    %120 = vmatmul.mubr.f32.gmra.mrb[0].mxu0 %v44
    %v121 = vpop.f32.mrb[0].mxu0
    %v122 = vadd.f32 0.0, %v121
    %v123 = vpop.f32.mrb[0].mxu0
    %124 = vmatprep.mubr.f32.mxu0 0.0
    %125 = vmatmul.mubr.f32.gmra.mrb[0].mxu0 %v47
    %v126 = vpop.f32.mrb[0].mxu0
    %v127 = vadd.f32 0.0, %v126
    %v128 = vpop.f32.mrb[0].mxu0
    %129 = vmatprep.mubr.f32.mxu0 0.0
    %130 = vmatmul.mubr.f32.gmra.mrb[0].mxu0 %v50
    %v131 = vpop.f32.mrb[0].mxu0
    %v132 = vadd.f32 0.0, %v131
    %v133 = vpop.f32.mrb[0].mxu0
    %134 = vmatprep.mubr.f32.mxu0 0.0
    %135 = vmatmul.mubr.f32.gmra.mrb[0].mxu0 %v53
    %v136 = vpop.f32.mrb[0].mxu0
    %v137 = vadd.f32 0.0, %v136
    %v138 = vpop.f32.mrb[0].mxu0
    %139 = vdwg.mxu0
    %v140 = vlaneseq
    %v141 = vshrl.u32 %v140, 7
    %v142 = vsub.s32 0, %v141
    %v143 = vrot.slane %v40, %v142
    %vm144 = vcmask 261120
    %v146 = vsel %vm144, %v32, 0
    %v149 = vsel %vm144, %v33, 0
    %v152 = vsel %vm144, %v34, 0
    %v155 = vsel %vm144, %v35, 0
    %157 = vmatprep.subr.mxu0 0.0
    %158 = vmatpush1.msra.mxu0 %v122
    %159 = vmatprep.subr.mxu0 0.0
    %160 = vmatpush1.msra.mxu0 %v127
    %161 = vmatprep.subr.mxu0 0.0
    %162 = vmatpush1.msra.mxu0 %v132
    %163 = vmatprep.subr.mxu0 0.0
    %164 = vmatpush1.msra.mxu0 %v137
    %165 = vmatprep.subr.mxu0 0.0
    %166 = vmatpush1.msra.mxu0 0.0
    %167 = vmatprep.subr.mxu0 0.0
    %168 = vmatpush1.msra.mxu0 0.0
    %169 = vmatprep.subr.mxu0 0.0
    %170 = vmatpush1.msra.mxu0 0.0
    %171 = vmatprep.subr.mxu0 0.0
    %172 = vmatpush1.msra.mxu0 0.0
    %173 = vmatprep.subr.mxu0 0.0
    %174 = vmatpush1.msra.mxu0 0.0
    %175 = vmatprep.subr.mxu0 0.0
    %176 = vmatpush1.msra.mxu0 0.0
    %177 = vmatprep.subr.mxu0 0.0
    %178 = vmatpush1.msra.mxu0 0.0
    %179 = vmatprep.subr.mxu0 0.0
    %180 = vmatpush1.msra.mxu0 0.0
    %181 = vmatprep.subr.mxu0 0.0
    %182 = vmatpush1.msra.mxu0 0.0
    %183 = vmatprep.subr.mxu0 0.0
    %184 = vmatpush1.msra.mxu0 0.0
    %185 = vmatprep.subr.mxu0 0.0
    %186 = vmatpush1.msra.mxu0 0.0
    %187 = vmatprep.subr.mxu0 0.0
    %188 = vmatpush1.msra.mxu0 0.0
    %189 = vmatprep.subr.mxu0 0.0
    %190 = vmatpush1.msra.mxu0 0.0
    %191 = vmatprep.subr.mxu0 0.0
    %192 = vmatpush1.msra.mxu0 0.0
    %193 = vmatprep.subr.mxu0 0.0
    %194 = vmatpush1.msra.mxu0 0.0
    %195 = vmatprep.subr.mxu0 0.0
    %196 = vmatpush1.msra.mxu0 0.0
    %197 = vmatprep.subr.mxu0 0.0
    %198 = vmatpush1.msra.mxu0 0.0
    %199 = vmatprep.subr.mxu0 0.0
    %200 = vmatpush1.msra.mxu0 0.0
    %201 = vmatprep.subr.mxu0 0.0
    %202 = vmatpush1.msra.mxu0 0.0
    %203 = vmatprep.subr.mxu0 0.0
    %204 = vmatpush1.msra.mxu0 0.0
    %205 = vmatprep.subr.mxu0 0.0
    %206 = vmatpush1.msra.mxu0 0.0
    %207 = vmatprep.subr.mxu0 0.0
    %208 = vmatpush1.msra.mxu0 0.0
    %209 = vmatprep.subr.mxu0 0.0
    %210 = vmatpush1.msra.mxu0 0.0
    %211 = vmatprep.subr.mxu0 0.0
    %212 = vmatpush1.msra.mxu0 0.0
    %213 = vmatprep.subr.mxu0 0.0
    %214 = vmatpush1.msra.mxu0 0.0
    %215 = vmatprep.subr.mxu0 0.0
    %216 = vmatpush1.msra.mxu0 0.0
    %217 = vmatprep.subr.mxu0 0.0
    %218 = vmatpush1.msra.mxu0 0.0
    %219 = vmatprep.subr.mxu0 0.0
    %220 = vmatpush1.msra.mxu0 0.0
    %221 = vmatprep.mubr.f32.mxu0 0.0
    %222 = vmatmul.mubr.f32.gmra.mrb[0].mxu0 %v146
    %v223 = vpop.f32.mrb[0].mxu0
    %v224 = vadd.f32 %v143, %v223
    %v225 = vpop.f32.mrb[0].mxu0
    %226 = vmatprep.mubr.f32.mxu0 0.0
    %227 = vmatmul.mubr.f32.gmra.mrb[0].mxu0 %v149
    %v228 = vpop.f32.mrb[0].mxu0
    %v229 = vadd.f32 %v143, %v228
    %v230 = vpop.f32.mrb[0].mxu0
    %231 = vmatprep.mubr.f32.mxu0 0.0
    %232 = vmatmul.mubr.f32.gmra.mrb[0].mxu0 %v152
    %v233 = vpop.f32.mrb[0].mxu0
    %v234 = vadd.f32 %v143, %v233
    %v235 = vpop.f32.mrb[0].mxu0
    %236 = vmatprep.mubr.f32.mxu0 0.0
    %237 = vmatmul.mubr.f32.gmra.mrb[0].mxu0 %v155
    %v238 = vpop.f32.mrb[0].mxu0
    %v239 = vadd.f32 %v143, %v238
    %v240 = vpop.f32.mrb[0].mxu0
    %241 = vdwg.mxu0
    %v242 = vmax.f32 %v224, 0.0
    %v243 = vmax.f32 %v229, 0.0
    %v244 = vmax.f32 %v234, 0.0
    %v245 = vmax.f32 %v239, 0.0
    %v246 = vld [vmem:[#allocation3 + $0x8] sm:$0xff]
    %v247 = vld [vmem:[#allocation3 + $0x10] sm:$0xff]
    %v248 = vld [vmem:[#allocation3 + $0x18] sm:$0xff]
    %v249 = vld [vmem:[#allocation3 + $0x20] sm:$0xff]
    %v250 = vld [vmem:[#allocation3 + $0x28] sm:$0xff]
    %v251 = vld [vmem:[#allocation3 + $0x30] sm:$0xff]
    %v252 = vld [vmem:[#allocation3 + $0x38] sm:$0xff]
    %v253 = vld [vmem:[#allocation3 + $0x40] sm:$0xff]
    %v254 = vld [vmem:[#allocation3 + $0x48] sm:$0xff]
    %v255 = vld [vmem:[#allocation3 + $0x50] sm:$0xff]
    %v256 = vld [vmem:[#allocation3 + $0x58] sm:$0xff]
    %v257 = vld [vmem:[#allocation3 + $0x60] sm:$0xff]
    %v258 = vld [vmem:[#allocation3 + $0x68] sm:$0xff]
    %v259 = vld [vmem:[#allocation3 + $0x70] sm:$0xff]
    %v260 = vld [vmem:[#allocation3 + $0x78] sm:$0xff]
    %v261 = vld [vmem:[#allocation3 + $0x80] sm:$0xff]
    %262 = vmatprep.subr.mxu0 0.0
    %263 = vmatpush1.msra.mxu0 %v246
    %264 = vmatprep.subr.mxu0 0.0
    %265 = vmatpush1.msra.mxu0 %v247
    %266 = vmatprep.subr.mxu0 0.0
    %267 = vmatpush1.msra.mxu0 %v248
    %268 = vmatprep.subr.mxu0 0.0
    %269 = vmatpush1.msra.mxu0 %v249
    %270 = vmatprep.subr.mxu0 0.0
    %271 = vmatpush1.msra.mxu0 %v250
    %272 = vmatprep.subr.mxu0 0.0
    %273 = vmatpush1.msra.mxu0 %v251
    %274 = vmatprep.subr.mxu0 0.0
    %275 = vmatpush1.msra.mxu0 %v252
    %276 = vmatprep.subr.mxu0 0.0
    %277 = vmatpush1.msra.mxu0 %v253
    %278 = vmatprep.subr.mxu0 0.0
    %279 = vmatpush1.msra.mxu0 %v254
    %280 = vmatprep.subr.mxu0 0.0
    %281 = vmatpush1.msra.mxu0 %v255
    %282 = vmatprep.subr.mxu0 0.0
    %283 = vmatpush1.msra.mxu0 %v256
    %284 = vmatprep.subr.mxu0 0.0
    %285 = vmatpush1.msra.mxu0 %v257
    %286 = vmatprep.subr.mxu0 0.0
    %287 = vmatpush1.msra.mxu0 %v258
    %288 = vmatprep.subr.mxu0 0.0
    %289 = vmatpush1.msra.mxu0 %v259
    %290 = vmatprep.subr.mxu0 0.0
    %291 = vmatpush1.msra.mxu0 %v260
    %292 = vmatprep.subr.mxu0 0.0
    %293 = vmatpush1.msra.mxu0 %v261
    %294 = vmatprep.subr.mxu0 0.0
    %295 = vmatpush1.msra.mxu0 0.0
    %296 = vmatprep.subr.mxu0 0.0
    %297 = vmatpush1.msra.mxu0 0.0
    %298 = vmatprep.subr.mxu0 0.0
    %299 = vmatpush1.msra.mxu0 0.0
    %300 = vmatprep.subr.mxu0 0.0
    %301 = vmatpush1.msra.mxu0 0.0
    %302 = vmatprep.subr.mxu0 0.0
    %303 = vmatpush1.msra.mxu0 0.0
    %304 = vmatprep.subr.mxu0 0.0
    %305 = vmatpush1.msra.mxu0 0.0
    %306 = vmatprep.subr.mxu0 0.0
    %307 = vmatpush1.msra.mxu0 0.0
    %308 = vmatprep.subr.mxu0 0.0
    %309 = vmatpush1.msra.mxu0 0.0
    %310 = vmatprep.subr.mxu0 0.0
    %311 = vmatpush1.msra.mxu0 0.0
    %312 = vmatprep.subr.mxu0 0.0
    %313 = vmatpush1.msra.mxu0 0.0
    %314 = vmatprep.subr.mxu0 0.0
    %315 = vmatpush1.msra.mxu0 0.0
    %316 = vmatprep.subr.mxu0 0.0
    %317 = vmatpush1.msra.mxu0 0.0
    %318 = vmatprep.subr.mxu0 0.0
    %319 = vmatpush1.msra.mxu0 0.0
    %320 = vmatprep.subr.mxu0 0.0
    %321 = vmatpush1.msra.mxu0 0.0
    %322 = vmatprep.subr.mxu0 0.0
    %323 = vmatpush1.msra.mxu0 0.0
    %324 = vmatprep.subr.mxu0 0.0
    %325 = vmatpush1.msra.mxu0 0.0
    %326 = vmatprep.mubr.f32.mxu0 0.0
    %327 = vmatmul.mubr.f32.gmra.mrb[0].mxu0 %v242
    %v328 = vpop.f32.mrb[0].mxu0
    %v329 = vadd.f32 0.0, %v328
    %v330 = vpop.f32.mrb[0].mxu0
    %331 = vmatprep.mubr.f32.mxu0 0.0
    %332 = vmatmul.mubr.f32.gmra.mrb[0].mxu0 %v243
    %v333 = vpop.f32.mrb[0].mxu0
    %v334 = vadd.f32 0.0, %v333
    %v335 = vpop.f32.mrb[0].mxu0
    %336 = vmatprep.mubr.f32.mxu0 0.0
    %337 = vmatmul.mubr.f32.gmra.mrb[0].mxu0 %v244
    %v338 = vpop.f32.mrb[0].mxu0
    %v339 = vadd.f32 0.0, %v338
    %v340 = vpop.f32.mrb[0].mxu0
    %341 = vmatprep.mubr.f32.mxu0 0.0
    %342 = vmatmul.mubr.f32.gmra.mrb[0].mxu0 %v245
    %v343 = vpop.f32.mrb[0].mxu0
    %v344 = vadd.f32 0.0, %v343
    %v345 = vpop.f32.mrb[0].mxu0
    %346 = vdwg.mxu0
    %v347 = vlaneseq
    %v348 = vshrl.u32 %v347, 7
    %v349 = vsub.s32 1, %v348
    %v350 = vrot.slane %v40, %v349
    %351 = vmatprep.subr.mxu0 0.0
    %352 = vmatpush1.msra.mxu0 %v329
    %353 = vmatprep.subr.mxu0 0.0
    %354 = vmatpush1.msra.mxu0 %v334
    %355 = vmatprep.subr.mxu0 0.0
    %356 = vmatpush1.msra.mxu0 %v339
    %357 = vmatprep.subr.mxu0 0.0
    %358 = vmatpush1.msra.mxu0 %v344
    %359 = vmatprep.subr.mxu0 0.0
    %360 = vmatpush1.msra.mxu0 0.0
    %361 = vmatprep.subr.mxu0 0.0
    %362 = vmatpush1.msra.mxu0 0.0
    %363 = vmatprep.subr.mxu0 0.0
    %364 = vmatpush1.msra.mxu0 0.0
    %365 = vmatprep.subr.mxu0 0.0
    %366 = vmatpush1.msra.mxu0 0.0
    %367 = vmatprep.subr.mxu0 0.0
    %368 = vmatpush1.msra.mxu0 0.0
    %369 = vmatprep.subr.mxu0 0.0
    %370 = vmatpush1.msra.mxu0 0.0
    %371 = vmatprep.subr.mxu0 0.0
    %372 = vmatpush1.msra.mxu0 0.0
    %373 = vmatprep.subr.mxu0 0.0
    %374 = vmatpush1.msra.mxu0 0.0
    %375 = vmatprep.subr.mxu0 0.0
    %376 = vmatpush1.msra.mxu0 0.0
    %377 = vmatprep.subr.mxu0 0.0
    %378 = vmatpush1.msra.mxu0 0.0
    %379 = vmatprep.subr.mxu0 0.0
    %380 = vmatpush1.msra.mxu0 0.0
    %381 = vmatprep.subr.mxu0 0.0
    %382 = vmatpush1.msra.mxu0 0.0
    %383 = vmatprep.subr.mxu0 0.0
    %384 = vmatpush1.msra.mxu0 0.0
    %385 = vmatprep.subr.mxu0 0.0
    %386 = vmatpush1.msra.mxu0 0.0
    %387 = vmatprep.subr.mxu0 0.0
    %388 = vmatpush1.msra.mxu0 0.0
    %389 = vmatprep.subr.mxu0 0.0
    %390 = vmatpush1.msra.mxu0 0.0
    %391 = vmatprep.subr.mxu0 0.0
    %392 = vmatpush1.msra.mxu0 0.0
    %393 = vmatprep.subr.mxu0 0.0
    %394 = vmatpush1.msra.mxu0 0.0
    %395 = vmatprep.subr.mxu0 0.0
    %396 = vmatpush1.msra.mxu0 0.0
    %397 = vmatprep.subr.mxu0 0.0
    %398 = vmatpush1.msra.mxu0 0.0
    %399 = vmatprep.subr.mxu0 0.0
    %400 = vmatpush1.msra.mxu0 0.0
    %401 = vmatprep.subr.mxu0 0.0
    %402 = vmatpush1.msra.mxu0 0.0
    %403 = vmatprep.subr.mxu0 0.0
    %404 = vmatpush1.msra.mxu0 0.0
    %405 = vmatprep.subr.mxu0 0.0
    %406 = vmatpush1.msra.mxu0 0.0
    %407 = vmatprep.subr.mxu0 0.0
    %408 = vmatpush1.msra.mxu0 0.0
    %409 = vmatprep.subr.mxu0 0.0
    %410 = vmatpush1.msra.mxu0 0.0
    %411 = vmatprep.subr.mxu0 0.0
    %412 = vmatpush1.msra.mxu0 0.0
    %413 = vmatprep.subr.mxu0 0.0
    %414 = vmatpush1.msra.mxu0 0.0
    %415 = vmatprep.mubr.f32.mxu0 0.0
    %416 = vmatmul.mubr.f32.gmra.mrb[0].mxu0 %v146
    %v417 = vpop.f32.mrb[0].mxu0
    %v418 = vadd.f32 %v350, %v417
    %v419 = vpop.f32.mrb[0].mxu0
    %420 = vmatprep.mubr.f32.mxu0 0.0
    %421 = vmatmul.mubr.f32.gmra.mrb[0].mxu0 %v149
    %v422 = vpop.f32.mrb[0].mxu0
    %v423 = vadd.f32 %v350, %v422
    %v424 = vpop.f32.mrb[0].mxu0
    %425 = vmatprep.mubr.f32.mxu0 0.0
    %426 = vmatmul.mubr.f32.gmra.mrb[0].mxu0 %v152
    %v427 = vpop.f32.mrb[0].mxu0
    %v428 = vadd.f32 %v350, %v427
    %v429 = vpop.f32.mrb[0].mxu0
    %430 = vmatprep.mubr.f32.mxu0 0.0
    %431 = vmatmul.mubr.f32.gmra.mrb[0].mxu0 %v155
    %v432 = vpop.f32.mrb[0].mxu0
    %v433 = vadd.f32 %v350, %v432
    %v434 = vpop.f32.mrb[0].mxu0
    %435 = vdwg.mxu0
    %v436 = vmax.f32 %v418, 0.0
    %v437 = vmax.f32 %v423, 0.0
    %v438 = vmax.f32 %v428, 0.0
    %v439 = vmax.f32 %v433, 0.0
    %v440 = vld [vmem:[#allocation3 + $0x88] sm:$0xff]
    %v441 = vld [vmem:[#allocation3 + $0x90] sm:$0xff]
    %v442 = vld [vmem:[#allocation3 + $0x98] sm:$0xff]
    %v443 = vld [vmem:[#allocation3 + $0xa0] sm:$0xff]
    %v444 = vld [vmem:[#allocation3 + $0xa8] sm:$0xff]
    %v445 = vld [vmem:[#allocation3 + $0xb0] sm:$0xff]
    %v446 = vld [vmem:[#allocation3 + $0xb8] sm:$0xff]
    %v447 = vld [vmem:[#allocation3 + $0xc0] sm:$0xff]
    %v448 = vld [vmem:[#allocation3 + $0xc8] sm:$0xff]
    %v449 = vld [vmem:[#allocation3 + $0xd0] sm:$0xff]
    %v450 = vld [vmem:[#allocation3 + $0xd8] sm:$0xff]
    %v451 = vld [vmem:[#allocation3 + $0xe0] sm:$0xff]
    %v452 = vld [vmem:[#allocation3 + $0xe8] sm:$0xff]
    %v453 = vld [vmem:[#allocation3 + $0xf0] sm:$0xff]
    %v454 = vld [vmem:[#allocation3 + $0xf8] sm:$0xff]
    %v455 = vld [vmem:[#allocation3 + $0x100] sm:$0xff]
    %456 = vmatprep.subr.mxu0 0.0
    %457 = vmatpush1.msra.mxu0 %v440
    %458 = vmatprep.subr.mxu0 0.0
    %459 = vmatpush1.msra.mxu0 %v441
    %460 = vmatprep.subr.mxu0 0.0
    %461 = vmatpush1.msra.mxu0 %v442
    %462 = vmatprep.subr.mxu0 0.0
    %463 = vmatpush1.msra.mxu0 %v443
    %464 = vmatprep.subr.mxu0 0.0
    %465 = vmatpush1.msra.mxu0 %v444
    %466 = vmatprep.subr.mxu0 0.0
    %467 = vmatpush1.msra.mxu0 %v445
    %468 = vmatprep.subr.mxu0 0.0
    %469 = vmatpush1.msra.mxu0 %v446
    %470 = vmatprep.subr.mxu0 0.0
    %471 = vmatpush1.msra.mxu0 %v447
    %472 = vmatprep.subr.mxu0 0.0
    %473 = vmatpush1.msra.mxu0 %v448
    %474 = vmatprep.subr.mxu0 0.0
    %475 = vmatpush1.msra.mxu0 %v449
    %476 = vmatprep.subr.mxu0 0.0
    %477 = vmatpush1.msra.mxu0 %v450
    %478 = vmatprep.subr.mxu0 0.0
    %479 = vmatpush1.msra.mxu0 %v451
    %480 = vmatprep.subr.mxu0 0.0
    %481 = vmatpush1.msra.mxu0 %v452
    %482 = vmatprep.subr.mxu0 0.0
    %483 = vmatpush1.msra.mxu0 %v453
    %484 = vmatprep.subr.mxu0 0.0
    %485 = vmatpush1.msra.mxu0 %v454
    %486 = vmatprep.subr.mxu0 0.0
    %487 = vmatpush1.msra.mxu0 %v455
    %488 = vmatprep.subr.mxu0 0.0
    %489 = vmatpush1.msra.mxu0 0.0
    %490 = vmatprep.subr.mxu0 0.0
    %491 = vmatpush1.msra.mxu0 0.0
    %492 = vmatprep.subr.mxu0 0.0
    %493 = vmatpush1.msra.mxu0 0.0
    %494 = vmatprep.subr.mxu0 0.0
    %495 = vmatpush1.msra.mxu0 0.0
    %496 = vmatprep.subr.mxu0 0.0
    %497 = vmatpush1.msra.mxu0 0.0
    %498 = vmatprep.subr.mxu0 0.0
    %499 = vmatpush1.msra.mxu0 0.0
    %500 = vmatprep.subr.mxu0 0.0
    %501 = vmatpush1.msra.mxu0 0.0
    %502 = vmatprep.subr.mxu0 0.0
    %503 = vmatpush1.msra.mxu0 0.0
    %504 = vmatprep.subr.mxu0 0.0
    %505 = vmatpush1.msra.mxu0 0.0
    %506 = vmatprep.subr.mxu0 0.0
    %507 = vmatpush1.msra.mxu0 0.0
    %508 = vmatprep.subr.mxu0 0.0
    %509 = vmatpush1.msra.mxu0 0.0
    %510 = vmatprep.subr.mxu0 0.0
    %511 = vmatpush1.msra.mxu0 0.0
    %512 = vmatprep.subr.mxu0 0.0
    %513 = vmatpush1.msra.mxu0 0.0
    %514 = vmatprep.subr.mxu0 0.0
    %515 = vmatpush1.msra.mxu0 0.0
    %516 = vmatprep.subr.mxu0 0.0
    %517 = vmatpush1.msra.mxu0 0.0
    %518 = vmatprep.subr.mxu0 0.0
    %519 = vmatpush1.msra.mxu0 0.0
    %520 = vmatprep.mubr.f32.mxu0 0.0
    %521 = vmatmul.mubr.f32.gmra.mrb[0].mxu0 %v436
    %v522 = vpop.f32.mrb[0].mxu0
    %v523 = vadd.f32 0.0, %v522
    %v524 = vpop.f32.mrb[0].mxu0
    %525 = vmatprep.mubr.f32.mxu0 0.0
    %526 = vmatmul.mubr.f32.gmra.mrb[0].mxu0 %v437
    %v527 = vpop.f32.mrb[0].mxu0
    %v528 = vadd.f32 0.0, %v527
    %v529 = vpop.f32.mrb[0].mxu0
    %530 = vmatprep.mubr.f32.mxu0 0.0
    %531 = vmatmul.mubr.f32.gmra.mrb[0].mxu0 %v438
    %v532 = vpop.f32.mrb[0].mxu0
    %v533 = vadd.f32 0.0, %v532
    %v534 = vpop.f32.mrb[0].mxu0
    %535 = vmatprep.mubr.f32.mxu0 0.0
    %536 = vmatmul.mubr.f32.gmra.mrb[0].mxu0 %v439
    %v537 = vpop.f32.mrb[0].mxu0
    %v538 = vadd.f32 0.0, %v537
    %v539 = vpop.f32.mrb[0].mxu0
    %540 = vdwg.mxu0
    %v541 = vlaneseq
    %v542 = vshrl.u32 %v541, 7
    %v543 = vsub.s32 2, %v542
    %v544 = vrot.slane %v40, %v543
    %545 = vmatprep.subr.mxu0 0.0
    %546 = vmatpush1.msra.mxu0 %v523
    %547 = vmatprep.subr.mxu0 0.0
    %548 = vmatpush1.msra.mxu0 %v528
    %549 = vmatprep.subr.mxu0 0.0
    %550 = vmatpush1.msra.mxu0 %v533
    %551 = vmatprep.subr.mxu0 0.0
    %552 = vmatpush1.msra.mxu0 %v538
    %553 = vmatprep.subr.mxu0 0.0
    %554 = vmatpush1.msra.mxu0 0.0
    %555 = vmatprep.subr.mxu0 0.0
    %556 = vmatpush1.msra.mxu0 0.0
    %557 = vmatprep.subr.mxu0 0.0
    %558 = vmatpush1.msra.mxu0 0.0
    %559 = vmatprep.subr.mxu0 0.0
    %560 = vmatpush1.msra.mxu0 0.0
    %561 = vmatprep.subr.mxu0 0.0
    %562 = vmatpush1.msra.mxu0 0.0
    %563 = vmatprep.subr.mxu0 0.0
    %564 = vmatpush1.msra.mxu0 0.0
    %565 = vmatprep.subr.mxu0 0.0
    %566 = vmatpush1.msra.mxu0 0.0
    %567 = vmatprep.subr.mxu0 0.0
    %568 = vmatpush1.msra.mxu0 0.0
    %569 = vmatprep.subr.mxu0 0.0
    %570 = vmatpush1.msra.mxu0 0.0
    %571 = vmatprep.subr.mxu0 0.0
    %572 = vmatpush1.msra.mxu0 0.0
    %573 = vmatprep.subr.mxu0 0.0
    %574 = vmatpush1.msra.mxu0 0.0
    %575 = vmatprep.subr.mxu0 0.0
    %576 = vmatpush1.msra.mxu0 0.0
    %577 = vmatprep.subr.mxu0 0.0
    %578 = vmatpush1.msra.mxu0 0.0
    %579 = vmatprep.subr.mxu0 0.0
    %580 = vmatpush1.msra.mxu0 0.0
    %581 = vmatprep.subr.mxu0 0.0
    %582 = vmatpush1.msra.mxu0 0.0
    %583 = vmatprep.subr.mxu0 0.0
    %584 = vmatpush1.msra.mxu0 0.0
    %585 = vmatprep.subr.mxu0 0.0
    %586 = vmatpush1.msra.mxu0 0.0
    %587 = vmatprep.subr.mxu0 0.0
    %588 = vmatpush1.msra.mxu0 0.0
    %589 = vmatprep.subr.mxu0 0.0
    %590 = vmatpush1.msra.mxu0 0.0
    %591 = vmatprep.subr.mxu0 0.0
    %592 = vmatpush1.msra.mxu0 0.0
    %593 = vmatprep.subr.mxu0 0.0
    %594 = vmatpush1.msra.mxu0 0.0
    %595 = vmatprep.subr.mxu0 0.0
    %596 = vmatpush1.msra.mxu0 0.0
    %597 = vmatprep.subr.mxu0 0.0
    %598 = vmatpush1.msra.mxu0 0.0
    %599 = vmatprep.subr.mxu0 0.0
    %600 = vmatpush1.msra.mxu0 0.0
    %601 = vmatprep.subr.mxu0 0.0
    %602 = vmatpush1.msra.mxu0 0.0
    %603 = vmatprep.subr.mxu0 0.0
    %604 = vmatpush1.msra.mxu0 0.0
    %605 = vmatprep.subr.mxu0 0.0
    %606 = vmatpush1.msra.mxu0 0.0
    %607 = vmatprep.subr.mxu0 0.0
    %608 = vmatpush1.msra.mxu0 0.0
    %609 = vmatprep.mubr.f32.mxu0 0.0
    %610 = vmatmul.mubr.f32.gmra.mrb[0].mxu0 %v146
    %v611 = vpop.f32.mrb[0].mxu0
    %v612 = vadd.f32 %v544, %v611
    %v613 = vpop.f32.mrb[0].mxu0
    %614 = vmatprep.mubr.f32.mxu0 0.0
    %615 = vmatmul.mubr.f32.gmra.mrb[0].mxu0 %v149
    %v616 = vpop.f32.mrb[0].mxu0
    %v617 = vadd.f32 %v544, %v616
    %v618 = vpop.f32.mrb[0].mxu0
    %619 = vmatprep.mubr.f32.mxu0 0.0
    %620 = vmatmul.mubr.f32.gmra.mrb[0].mxu0 %v152
    %v621 = vpop.f32.mrb[0].mxu0
    %v622 = vadd.f32 %v544, %v621
    %v623 = vpop.f32.mrb[0].mxu0
    %624 = vmatprep.mubr.f32.mxu0 0.0
    %625 = vmatmul.mubr.f32.gmra.mrb[0].mxu0 %v155
    %v626 = vpop.f32.mrb[0].mxu0
    %v627 = vadd.f32 %v544, %v626
    %v628 = vpop.f32.mrb[0].mxu0
    %629 = vdwg.mxu0
    %v630 = vmax.f32 %v612, 0.0
    %v631 = vmax.f32 %v617, 0.0
    %v632 = vmax.f32 %v622, 0.0
    %v633 = vmax.f32 %v627, 0.0
    %v634 = vrot.slane %v630, 4
    %v635 = vmax.f32 %v630, %v634
    %v636 = vrot.slane %v635, 2
    %v637 = vmax.f32 %v635, %v636
    %v638 = vrot.slane %v637, 1
    %v639 = vmax.f32 %v637, %v638
    %640 = vst [vmem:[#allocation2] sm:$0x1] %v639
    %v641 = vrot.slane %v631, 4
    %v642 = vmax.f32 %v631, %v641
    %v643 = vrot.slane %v642, 2
    %v644 = vmax.f32 %v642, %v643
    %v645 = vrot.slane %v644, 1
    %v646 = vmax.f32 %v644, %v645
    %647 = vst [vmem:[#allocation2 + $0x1] sm:$0x1] %v646
    %v648 = vrot.slane %v632, 4
    %v649 = vmax.f32 %v632, %v648
    %v650 = vrot.slane %v649, 2
    %v651 = vmax.f32 %v649, %v650
    %v652 = vrot.slane %v651, 1
    %v653 = vmax.f32 %v651, %v652
    %654 = vst [vmem:[#allocation2 + $0x2] sm:$0x1] %v653
    %v655 = vrot.slane %v633, 4
    %v656 = vmax.f32 %v633, %v655
    %v657 = vrot.slane %v656, 2
    %v658 = vmax.f32 %v656, %v657
    %v659 = vrot.slane %v658, 1
    %v660 = vmax.f32 %v658, %v659
    %661 = vst [vmem:[#allocation2 + $0x3] sm:$0x1] %v660
    %v662 = vld [vmem:[#allocation2] sm:$0xf]
    %v663 = vld [vmem:[#allocation3 + $0x108] sm:$0xff]
    %v664 = vld [vmem:[#allocation3 + $0x110] sm:$0xff]
    %v665 = vld [vmem:[#allocation3 + $0x118] sm:$0xff]
    %v666 = vld [vmem:[#allocation3 + $0x120] sm:$0xff]
    %v667 = vld [vmem:[#allocation3 + $0x128] sm:$0xff]
    %v668 = vld [vmem:[#allocation3 + $0x130] sm:$0xff]
    %v669 = vld [vmem:[#allocation3 + $0x138] sm:$0xff]
    %v670 = vld [vmem:[#allocation3 + $0x140] sm:$0xff]
    %v671 = vld [vmem:[#allocation3 + $0x148] sm:$0xff]
    %v672 = vld [vmem:[#allocation3 + $0x150] sm:$0xff]
    %v673 = vld [vmem:[#allocation3 + $0x158] sm:$0xff]
    %v674 = vld [vmem:[#allocation3 + $0x160] sm:$0xff]
    %v675 = vld [vmem:[#allocation3 + $0x168] sm:$0xff]
    %v676 = vld [vmem:[#allocation3 + $0x170] sm:$0xff]
    %v677 = vld [vmem:[#allocation3 + $0x178] sm:$0xff]
    %v678 = vld [vmem:[#allocation3 + $0x180] sm:$0xff]
    %v679 = vlaneseq
    %v680 = vshrl.u32 %v679, 7
    %v681 = vsub.s32 3, %v680
    %v682 = vrot.slane %v40, %v681
    %683 = vmatprep.subr.mxu0 0.0
    %684 = vmatpush1.msra.mxu0 %v663
    %685 = vmatprep.subr.mxu0 0.0
    %686 = vmatpush1.msra.mxu0 %v664
    %687 = vmatprep.subr.mxu0 0.0
    %688 = vmatpush1.msra.mxu0 %v665
    %689 = vmatprep.subr.mxu0 0.0
    %690 = vmatpush1.msra.mxu0 %v666
    %691 = vmatprep.subr.mxu0 0.0
    %692 = vmatpush1.msra.mxu0 %v667
    %693 = vmatprep.subr.mxu0 0.0
    %694 = vmatpush1.msra.mxu0 %v668
    %695 = vmatprep.subr.mxu0 0.0
    %696 = vmatpush1.msra.mxu0 %v669
    %697 = vmatprep.subr.mxu0 0.0
    %698 = vmatpush1.msra.mxu0 %v670
    %699 = vmatprep.subr.mxu0 0.0
    %700 = vmatpush1.msra.mxu0 %v671
    %701 = vmatprep.subr.mxu0 0.0
    %702 = vmatpush1.msra.mxu0 %v672
    %703 = vmatprep.subr.mxu0 0.0
    %704 = vmatpush1.msra.mxu0 %v673
    %705 = vmatprep.subr.mxu0 0.0
    %706 = vmatpush1.msra.mxu0 %v674
    %707 = vmatprep.subr.mxu0 0.0
    %708 = vmatpush1.msra.mxu0 %v675
    %709 = vmatprep.subr.mxu0 0.0
    %710 = vmatpush1.msra.mxu0 %v676
    %711 = vmatprep.subr.mxu0 0.0
    %712 = vmatpush1.msra.mxu0 %v677
    %713 = vmatprep.subr.mxu0 0.0
    %714 = vmatpush1.msra.mxu0 %v678
    %715 = vmatprep.subr.mxu0 0.0
    %716 = vmatpush1.msra.mxu0 0.0
    %717 = vmatprep.subr.mxu0 0.0
    %718 = vmatpush1.msra.mxu0 0.0
    %719 = vmatprep.subr.mxu0 0.0
    %720 = vmatpush1.msra.mxu0 0.0
    %721 = vmatprep.subr.mxu0 0.0
    %722 = vmatpush1.msra.mxu0 0.0
    %723 = vmatprep.subr.mxu0 0.0
    %724 = vmatpush1.msra.mxu0 0.0
    %725 = vmatprep.subr.mxu0 0.0
    %726 = vmatpush1.msra.mxu0 0.0
    %727 = vmatprep.subr.mxu0 0.0
    %728 = vmatpush1.msra.mxu0 0.0
    %729 = vmatprep.subr.mxu0 0.0
    %730 = vmatpush1.msra.mxu0 0.0
    %731 = vmatprep.subr.mxu0 0.0
    %732 = vmatpush1.msra.mxu0 0.0
    %733 = vmatprep.subr.mxu0 0.0
    %734 = vmatpush1.msra.mxu0 0.0
    %735 = vmatprep.subr.mxu0 0.0
    %736 = vmatpush1.msra.mxu0 0.0
    %737 = vmatprep.subr.mxu0 0.0
    %738 = vmatpush1.msra.mxu0 0.0
    %739 = vmatprep.subr.mxu0 0.0
    %740 = vmatpush1.msra.mxu0 0.0
    %741 = vmatprep.subr.mxu0 0.0
    %742 = vmatpush1.msra.mxu0 0.0
    %743 = vmatprep.subr.mxu0 0.0
    %744 = vmatpush1.msra.mxu0 0.0
    %745 = vmatprep.subr.mxu0 0.0
    %746 = vmatpush1.msra.mxu0 0.0
    %747 = vmatprep.mubr.f32.mxu0 0.0
    %748 = vmatmul.mubr.f32.gmra.mrb[0].mxu0 %v662
    %v749 = vpop.f32.mrb[0].mxu0
    %v750 = vadd.f32 %v682, %v749
    %v751 = vpop.f32.mrb[0].mxu0
    %752 = vdwg.mxu0
    %v753 = vmax.f32 %v750, 0.0
    %v754 = vld [vmem:[#allocation3 + $0x188] sm:$0xff]
    %v755 = vld [vmem:[#allocation3 + $0x190] sm:$0xff]
    %v756 = vld [vmem:[#allocation3 + $0x198] sm:$0xff]
    %v757 = vld [vmem:[#allocation3 + $0x1a0] sm:$0xff]
    %v758 = vld [vmem:[#allocation3 + $0x1a8] sm:$0xff]
    %v759 = vld [vmem:[#allocation3 + $0x1b0] sm:$0xff]
    %v760 = vld [vmem:[#allocation3 + $0x1b8] sm:$0xff]
    %v761 = vld [vmem:[#allocation3 + $0x1c0] sm:$0xff]
    %v762 = vld [vmem:[#allocation3 + $0x1c8] sm:$0xff]
    %v763 = vld [vmem:[#allocation3 + $0x1d0] sm:$0xff]
    %v764 = vld [vmem:[#allocation3 + $0x1d8] sm:$0xff]
    %v765 = vld [vmem:[#allocation3 + $0x1e0] sm:$0xff]
    %v766 = vld [vmem:[#allocation3 + $0x1e8] sm:$0xff]
    %v767 = vld [vmem:[#allocation3 + $0x1f0] sm:$0xff]
    %v768 = vld [vmem:[#allocation3 + $0x1f8] sm:$0xff]
    %v769 = vld [vmem:[#allocation3 + $0x200] sm:$0xff]
    %v770 = vlaneseq
    %v771 = vshrl.u32 %v770, 7
    %v772 = vsub.s32 4, %v771
    %v773 = vrot.slane %v40, %v772
    %774 = vmatprep.subr.mxu0 0.0
    %775 = vmatpush1.msra.mxu0 %v754
    %776 = vmatprep.subr.mxu0 0.0
    %777 = vmatpush1.msra.mxu0 %v755
    %778 = vmatprep.subr.mxu0 0.0
    %779 = vmatpush1.msra.mxu0 %v756
    %780 = vmatprep.subr.mxu0 0.0
    %781 = vmatpush1.msra.mxu0 %v757
    %782 = vmatprep.subr.mxu0 0.0
    %783 = vmatpush1.msra.mxu0 %v758
    %784 = vmatprep.subr.mxu0 0.0
    %785 = vmatpush1.msra.mxu0 %v759
    %786 = vmatprep.subr.mxu0 0.0
    %787 = vmatpush1.msra.mxu0 %v760
    %788 = vmatprep.subr.mxu0 0.0
    %789 = vmatpush1.msra.mxu0 %v761
    %790 = vmatprep.subr.mxu0 0.0
    %791 = vmatpush1.msra.mxu0 %v762
    %792 = vmatprep.subr.mxu0 0.0
    %793 = vmatpush1.msra.mxu0 %v763
    %794 = vmatprep.subr.mxu0 0.0
    %795 = vmatpush1.msra.mxu0 %v764
    %796 = vmatprep.subr.mxu0 0.0
    %797 = vmatpush1.msra.mxu0 %v765
    %798 = vmatprep.subr.mxu0 0.0
    %799 = vmatpush1.msra.mxu0 %v766
    %800 = vmatprep.subr.mxu0 0.0
    %801 = vmatpush1.msra.mxu0 %v767
    %802 = vmatprep.subr.mxu0 0.0
    %803 = vmatpush1.msra.mxu0 %v768
    %804 = vmatprep.subr.mxu0 0.0
    %805 = vmatpush1.msra.mxu0 %v769
    %806 = vmatprep.subr.mxu0 0.0
    %807 = vmatpush1.msra.mxu0 0.0
    %808 = vmatprep.subr.mxu0 0.0
    %809 = vmatpush1.msra.mxu0 0.0
    %810 = vmatprep.subr.mxu0 0.0
    %811 = vmatpush1.msra.mxu0 0.0
    %812 = vmatprep.subr.mxu0 0.0
    %813 = vmatpush1.msra.mxu0 0.0
    %814 = vmatprep.subr.mxu0 0.0
    %815 = vmatpush1.msra.mxu0 0.0
    %816 = vmatprep.subr.mxu0 0.0
    %817 = vmatpush1.msra.mxu0 0.0
    %818 = vmatprep.subr.mxu0 0.0
    %819 = vmatpush1.msra.mxu0 0.0
    %820 = vmatprep.subr.mxu0 0.0
    %821 = vmatpush1.msra.mxu0 0.0
    %822 = vmatprep.subr.mxu0 0.0
    %823 = vmatpush1.msra.mxu0 0.0
    %824 = vmatprep.subr.mxu0 0.0
    %825 = vmatpush1.msra.mxu0 0.0
    %826 = vmatprep.subr.mxu0 0.0
    %827 = vmatpush1.msra.mxu0 0.0
    %828 = vmatprep.subr.mxu0 0.0
    %829 = vmatpush1.msra.mxu0 0.0
    %830 = vmatprep.subr.mxu0 0.0
    %831 = vmatpush1.msra.mxu0 0.0
    %832 = vmatprep.subr.mxu0 0.0
    %833 = vmatpush1.msra.mxu0 0.0
    %834 = vmatprep.subr.mxu0 0.0
    %835 = vmatpush1.msra.mxu0 0.0
    %836 = vmatprep.subr.mxu0 0.0
    %837 = vmatpush1.msra.mxu0 0.0
    %838 = vmatprep.mubr.f32.mxu0 0.0
    %839 = vmatmul.mubr.f32.gmra.mrb[0].mxu0 %v753
    %v840 = vpop.f32.mrb[0].mxu0
    %v841 = vadd.f32 %v773, %v840
    %v842 = vpop.f32.mrb[0].mxu0
    %843 = vdwg.mxu0
    %v844 = vmul.f32 %v841, %v841
    %vm845 = vcmask 1043456
    %v846 = vsel %vm845, %v844, 0.0
    %847 = vadd.xlane.f32.xlu0 %v846
    %v848 = vpop.xlane.xlu0 %847
    %v849 = vmax.f32 %v848, 1e-24
    %v850 = vrsqrt.pop %v849
    %v851 = vmul.f32 %v841, %v850
    %vm852 = vcmask 519168
    %853 = vst.msk [vmem:[#allocation6] sm:$0xf] %vm852, %v851
    // Predicated region
    $region22: #{tpu_custom_call.1} parent=1 // pred_check
      _
    $region23: #{tpu_custom_call.1} parent=1 // pred_check_branch
      %855 = sbr.rel (0) target = $region25
    $region24: #{tpu_custom_call.1} parent=1 // pred_region
      %s857 = ssub.s32 64, 64
      %858 = vsyncadd [#allocation5], %s857
      %s860 = sshll.u32 [#allocation6], 4
      %s861 = int_to_ptr.vmem [resolvable:$true] %s860
      %863 = dma.vmem_to_hbm [thread:$0]  %s861, 64, %s4, [#allocation5]
    $region25: #{tpu_custom_call.1} parent=1 // pred_fallthru
      _
    // Predicated region
    $region26: #{tpu_custom_call.1} parent=1 // pred_check
      _
    $region27: #{tpu_custom_call.1} parent=1 // pred_check_branch
      %865 = sbr.rel (0) target = $region29
    $region28: #{tpu_custom_call.1} parent=1 // pred_region
      %866 = dma.done [#allocation5], 64
    $region29: #{tpu_custom_call.1} parent=1 // pred_fallthru
      _
    %867 = vsyncpa [#allocation4], 1
    %868 = vsyncpa [#allocation5], 1

</llo_original>
